<compile_context>
chip_gen: v7x
topology: tpu7x:2x2x1
jax: 0.10.0
libtpu: 0.0.40
codegen_flags: <defaults>
</compile_context>

<pallas_src>
import math

import jax
import jax.numpy as jnp
from jax.experimental import pallas as pl
from jax.experimental.pallas import tpu as pltpu


def gcn_filter_kernel(x_ref, adjT_ref, w_ref, b_ref, o_ref, acc_ref):
    k = pl.program_id(2)

    @pl.when(k == 0)
    def _():
        acc_ref[...] = jnp.zeros_like(acc_ref)

    # Graph aggregation on the MXU (bf16 operands, f32 accumulation):
    #   acc[n, m] += sum_k x[n, k] * adjT[k, m]
    acc_ref[...] += jnp.dot(x_ref[...], adjT_ref[...],
                            preferred_element_type=jnp.float32)

    @pl.when(k == pl.num_programs(2) - 1)
    def _():
        agg = acc_ref[...]                       # (tn, tm) f32
        w = w_ref[...]                           # (1, Fout) f32
        b = b_ref[...]                           # (1, Fout) f32
        # out[n, m, f] = agg[n, m] * w[0, f] + b[0, f]
        # Epilogue FMA in f32; cast only at the store (bf16 output halves
        # HBM writeback when the downstream consumer accepts it).
        # TODO(synk): check (bundle dump) whether this broadcast forces a
        # lanes->sublanes relayout of agg; if it becomes the binding XLU slot
        # after the write-traffic cuts, restructure the epilogue.
        out = agg[:, :, None] * w[None, :, :] + b[None, :, :]
        o_ref[...] = out.astype(o_ref.dtype)


def _round_up(x, m):
    return (x + m - 1) // m * m


def _vmem_capacity_bytes():
    try:
        return int(pltpu.get_tpu_info().vmem_capacity_bytes)
    except Exception:
        return 64 * 1024 * 1024  # conservative (v7x-class) fallback


def prepare_graph_conv_filter(adj, weight, bias=None):
    """Hoist loop-invariant prep (adj transpose + cast, w/b reshape).

    Call once per sequence in the GCN-LSTM and reuse across timesteps.
    """
    Fin, Fout = weight.shape
    assert Fin == 1, "GraphConvFilter forward path requires Fin == 1"
    adjT = jnp.transpose(adj).astype(jnp.bfloat16)        # adjT[k, m] = adj[m, k]
    w2 = weight.reshape(1, Fout).astype(jnp.float32)
    b2 = (jnp.zeros((1, Fout), jnp.float32) if bias is None
          else bias.reshape(1, Fout).astype(jnp.float32))
    return adjT, w2, b2


def graph_conv_filter_prepared(x2d, adjT, w2, b2, *, out_dtype=jnp.float32,
                               tile_n=None, tile_m=None, tile_k=None):
    """x2d: (N, M) bf16, adjT: (M, M) bf16, w2/b2: (1, Fout) f32."""
    N, M = x2d.shape
    Fout = w2.shape[1]

    # --- per-generation tile defaults --------------------------------------
    vmem_cap = _vmem_capacity_bytes()
    if vmem_cap <= 96 * 1024 * 1024:        # v7x-class: 64 MiB per TensorCore
        d_tn, d_tm, d_tk = 256, 512, 512
    else:                                   # v5e / v6e: 128 MiB
        d_tn, d_tm, d_tk = 512, 1024, 1024
    tile_n = d_tn if tile_n is None else tile_n
    tile_m = d_tm if tile_m is None else tile_m
    tile_k = d_tk if tile_k is None else tile_k
    assert tile_n % 8 == 0, "tile_n must be a multiple of 8"
    assert tile_m % 128 == 0, "tile_m must be a multiple of 128"
    assert tile_k % 128 == 0, "tile_k must be a multiple of 128"

    tn = N if N <= tile_n else tile_n
    tm = M if M <= tile_m else tile_m
    # Contraction axis must tile EXACTLY (OOB reads there would pollute valid
    # outputs); OOB on the n/m axes only produces dropped output writes.
    tk = tile_k if (M > tile_k and M % tile_k == 0) else M

    # Guarantee >= 2 parallel grid steps when cheap (v7x has 2 TensorCores;
    # a length-1 parallel grid leaves one idle there).
    if pl.cdiv(N, tn) * pl.cdiv(M, tm) == 1:
        if N >= 16:
            tn = _round_up(pl.cdiv(N, 2), 8)
        elif M >= 256:
            tm = _round_up(pl.cdiv(M, 2), 128)

    out_itemsize = jnp.dtype(out_dtype).itemsize

    # --- VMEM budget from the actual block footprint ------------------------
    footprint = (2 * tn * tk * 2            # x2d blocks  (bf16, double-buffered)
                 + 2 * tk * tm * 2          # adjT blocks (bf16, double-buffered)
                 + 2 * tn * tm * out_itemsize   # output blocks
                 + tn * tm * 4              # f32 accumulator scratch
                 + 2 * 2 * Fout * 4)        # w / b blocks (tiny)
    vmem_limit = max(32 * 1024 * 1024, 2 * footprint)
    vmem_limit = min(vmem_limit, vmem_cap - 8 * 1024 * 1024)
    vmem_limit = max(vmem_limit, footprint + 4 * 1024 * 1024)

    grid = (pl.cdiv(N, tn), pl.cdiv(M, tm), pl.cdiv(M, tk))

    # Advisory cost estimate: bandwidth-bound, output bytes dominate.
    flops = 2 * N * M * M + 2 * N * M * Fout
    bytes_accessed = (N * M * 2 + M * M * 2 + 2 * Fout * 4
                      + N * M * Fout * out_itemsize)

    return pl.pallas_call(
        gcn_filter_kernel,
        out_shape=jax.ShapeDtypeStruct((N, M, Fout), out_dtype),
        grid_spec=pltpu.PrefetchScalarGridSpec(
            num_scalar_prefetch=0,
            grid=grid,
            in_specs=[
                pl.BlockSpec((tn, tk), lambda i, j, k: (i, k)),     # x2d
                pl.BlockSpec((tk, tm), lambda i, j, k: (k, j)),     # adjT
                pl.BlockSpec((1, Fout), lambda i, j, k: (0, 0)),    # weight
                pl.BlockSpec((1, Fout), lambda i, j, k: (0, 0)),    # bias
            ],
            out_specs=pl.BlockSpec((tn, tm, Fout), lambda i, j, k: (i, j, 0)),
            scratch_shapes=[pltpu.VMEM((tn, tm), jnp.float32)],
        ),
        compiler_params=pltpu.CompilerParams(
            dimension_semantics=("parallel", "parallel", "arbitrary"),
            vmem_limit_bytes=int(vmem_limit),
        ),
        cost_estimate=pl.CostEstimate(
            flops=flops, transcendentals=0, bytes_accessed=bytes_accessed),
    )(x2d, adjT, w2, b2)


def graph_conv_filter(x, adj, weight, bias=None, **kwargs):
    """x: (N, M, Fin=1), adj: (M, M), weight: (1, Fout), bias: (Fout,) or None."""
    N, M, Fin = x.shape
    # TODO(synk): the PyTorch forward (squeeze + torch.mm) is only well-defined
    # for Fin == 1; the general Fin > 1 case is not implemented here either.
    assert Fin == 1, "GraphConvFilter forward path requires Fin == 1"
    adjT, w2, b2 = prepare_graph_conv_filter(adj, weight, bias)
    x2d = x[:, :, 0].astype(jnp.bfloat16)
    return graph_conv_filter_prepared(x2d, adjT, w2, b2, **kwargs)


def init_params(key, Fin, Fout, bias=True):
    # matches reset_parameters(): uniform(-stdv, stdv), stdv = 1/sqrt(Fout)
    stdv = 1.0 / math.sqrt(Fout)
    kw, kb = jax.random.split(key)
    weight = jax.random.uniform(kw, (Fin, Fout), jnp.float32, minval=-stdv, maxval=stdv)
    b = (jax.random.uniform(kb, (Fout,), jnp.float32, minval=-stdv, maxval=stdv)
         if bias else None)
    return weight, b


if __name__ == "__main__":
    key = jax.random.PRNGKey(0)
    k_x, k_adj, k_p = jax.random.split(key, 3)

    N, M, Fin, Fout = 8, 16, 1, 32
    x = jax.random.normal(k_x, (N, M, Fin), jnp.float32)
    adj = jax.random.normal(k_adj, (M, M), jnp.float32)
    weight, bias = init_params(k_p, Fin, Fout, bias=True)

    out = graph_conv_filter(x, adj, weight, bias)
    out = jax.block_until_ready(out)

    # Pure-JAX reference of the PyTorch forward, using the same bf16-rounded
    # matmul operands the kernel uses (f32 accumulation in both).
    x2d_bf = x[:, :, 0].astype(jnp.bfloat16).astype(jnp.float32)
    adjT_bf = adj.T.astype(jnp.bfloat16).astype(jnp.float32)
    agg_ref = x2d_bf @ adjT_bf                                     # (N, M)
    ref = agg_ref[:, :, None] * weight[0][None, None, :] + bias[None, None, :]

    assert out.shape == (N, M, Fout)
    assert out.dtype == jnp.float32
    assert jnp.allclose(out, ref, atol=1e-3, rtol=1e-3)

    print("KERNEL_OK")
</pallas_src>

<mosaic_0001>
module attributes {stable_mosaic.version = 11 : i64} {
  func.func @gcn_filter_kernel(%arg0: i32, %arg1: i32, %arg2: i32, %arg3: memref<8x16xbf16, #tpu.memory_space<vmem>>, %arg4: memref<16x16xbf16, #tpu.memory_space<vmem>>, %arg5: memref<1x32xf32, #tpu.memory_space<vmem>>, %arg6: memref<1x32xf32, #tpu.memory_space<vmem>>, %arg7: memref<8x16x32xf32, #tpu.memory_space<vmem>>, %arg8: memref<8x16xf32, #tpu.memory_space<vmem>>) attributes {dimension_semantics = [#tpu.dimension_semantics<parallel>, #tpu.dimension_semantics<parallel>, #tpu.dimension_semantics<arbitrary>], iteration_bounds = array<i64: 1, 1, 1>, scalar_prefetch = 0 : i64, scratch_operands = 1 : i64, tpu.core_type = #tpu.core_type<tc>, window_params = [{transform_indices = @transform_0, window_bounds = array<i64: 8, 16>}, {transform_indices = @transform_1, window_bounds = array<i64: 16, 16>}, {pipeline_mode = #tpu.pipeline_mode<synchronous>, transform_indices = @transform_2, window_bounds = array<i64: 1, 32>}, {pipeline_mode = #tpu.pipeline_mode<synchronous>, transform_indices = @transform_3, window_bounds = array<i64: 1, 32>}, {transform_indices = @transform_4, window_bounds = array<i64: 8, 16, 32>}]} {
    %c0_i32 = arith.constant 0 : i32
    %0 = arith.cmpi eq, %arg2, %c0_i32 : i32
    %1 = arith.extui %0 : i1 to i32
    %c0_i32_0 = arith.constant 0 : i32
    %2 = arith.cmpi ne, %1, %c0_i32_0 : i32
    scf.if %2 {
      %cst_10 = arith.constant 0.000000e+00 : f32
      %12 = vector.broadcast %cst_10 : f32 to vector<8x16xf32>
      %c0_11 = arith.constant 0 : index
      %c0_12 = arith.constant 0 : index
      %13 = vector.load %arg8[%c0_11, %c0_12] : memref<8x16xf32, #tpu.memory_space<vmem>>, vector<8x16xf32>
      tpu.vector_store %arg8[%c0_11, %c0_12], %12 {strides = array<i32>} : memref<8x16xf32, #tpu.memory_space<vmem>>, vector<8x16xf32>,
    } else {
    }
    %c0 = arith.constant 0 : index
    %c0_1 = arith.constant 0 : index
    %3 = vector.load %arg8[%c0, %c0_1] : memref<8x16xf32, #tpu.memory_space<vmem>>, vector<8x16xf32>
    %c0_2 = arith.constant 0 : index
    %c0_3 = arith.constant 0 : index
    %4 = vector.load %arg3[%c0_2, %c0_3] : memref<8x16xbf16, #tpu.memory_space<vmem>>, vector<8x16xbf16>
    %c0_4 = arith.constant 0 : index
    %c0_5 = arith.constant 0 : index
    %5 = vector.load %arg4[%c0_4, %c0_5] : memref<16x16xbf16, #tpu.memory_space<vmem>>, vector<16x16xbf16>
    %cst = arith.constant dense<0.000000e+00> : vector<8x16xf32>
    %6 = tpu.matmul %4, %5, %cst {dimension_numbers = #tpu.dot_dimension_numbers<[1], [0], [0], [1], [0, 0, 1, 1], [], []>} : vector<8x16xbf16>, vector<16x16xbf16>, vector<8x16xf32> -> vector<8x16xf32>
    %7 = arith.addf %3, %6 : vector<8x16xf32>
    %c0_6 = arith.constant 0 : index
    %c0_7 = arith.constant 0 : index
    %8 = vector.load %arg8[%c0_6, %c0_7] : memref<8x16xf32, #tpu.memory_space<vmem>>, vector<8x16xf32>
    tpu.vector_store %arg8[%c0_6, %c0_7], %7 {strides = array<i32>} : memref<8x16xf32, #tpu.memory_space<vmem>>, vector<8x16xf32>,
    %c0_i32_8 = arith.constant 0 : i32
    %9 = arith.cmpi eq, %arg2, %c0_i32_8 : i32
    %10 = arith.extui %9 : i1 to i32
    %c0_i32_9 = arith.constant 0 : i32
    %11 = arith.cmpi ne, %10, %c0_i32_9 : i32
    scf.if %11 {
      %c0_10 = arith.constant 0 : index
      %c0_11 = arith.constant 0 : index
      %12 = vector.load %arg8[%c0_10, %c0_11] : memref<8x16xf32, #tpu.memory_space<vmem>>, vector<8x16xf32>
      %c0_12 = arith.constant 0 : index
      %c0_13 = arith.constant 0 : index
      %13 = vector.load %arg5[%c0_12, %c0_13] : memref<1x32xf32, #tpu.memory_space<vmem>>, vector<1x32xf32>
      %c0_14 = arith.constant 0 : index
      %c0_15 = arith.constant 0 : index
      %14 = vector.load %arg6[%c0_14, %c0_15] : memref<1x32xf32, #tpu.memory_space<vmem>>, vector<1x32xf32>
      %15 = vector.shape_cast %12 : vector<8x16xf32> to vector<8x16x1xf32>
      %16 = vector.shape_cast %13 : vector<1x32xf32> to vector<1x1x32xf32>
      %17 = vector.broadcast %15 : vector<8x16x1xf32> to vector<8x16x32xf32>
      %18 = vector.broadcast %16 : vector<1x1x32xf32> to vector<8x16x32xf32>
      %19 = arith.mulf %17, %18 : vector<8x16x32xf32>
      %20 = vector.shape_cast %14 : vector<1x32xf32> to vector<1x1x32xf32>
      %21 = vector.broadcast %20 : vector<1x1x32xf32> to vector<8x16x32xf32>
      %22 = arith.addf %19, %21 : vector<8x16x32xf32>
      %c0_16 = arith.constant 0 : index
      %c0_17 = arith.constant 0 : index
      %c0_18 = arith.constant 0 : index
      %23 = vector.load %arg7[%c0_16, %c0_17, %c0_18] : memref<8x16x32xf32, #tpu.memory_space<vmem>>, vector<8x16x32xf32>
      tpu.vector_store %arg7[%c0_16, %c0_17, %c0_18], %22 {strides = array<i32>} : memref<8x16x32xf32, #tpu.memory_space<vmem>>, vector<8x16x32xf32>,
    } else {
    }
    return
  }
  func.func @transform_0(%arg0: i32, %arg1: i32, %arg2: i32) -> (i32, i32) {
    %c0_i32 = arith.constant 0 : i32
    return %arg0, %arg2 : i32, i32
  }
  func.func @transform_1(%arg0: i32, %arg1: i32, %arg2: i32) -> (i32, i32) {
    %c0_i32 = arith.constant 0 : i32
    return %arg2, %arg1 : i32, i32
  }
  func.func @transform_2(%arg0: i32, %arg1: i32, %arg2: i32) -> (i32, i32) {
    %c0_i32 = arith.constant 0 : i32
    %c0_i32_0 = arith.constant 0 : i32
    %c0_i32_1 = arith.constant 0 : i32
    return %c0_i32, %c0_i32_0 : i32, i32
  }
  func.func @transform_3(%arg0: i32, %arg1: i32, %arg2: i32) -> (i32, i32) {
    %c0_i32 = arith.constant 0 : i32
    %c0_i32_0 = arith.constant 0 : i32
    %c0_i32_1 = arith.constant 0 : i32
    return %c0_i32, %c0_i32_0 : i32, i32
  }
  func.func @transform_4(%arg0: i32, %arg1: i32, %arg2: i32) -> (i32, i32, i32) {
    %c0_i32 = arith.constant 0 : i32
    %c0_i32_0 = arith.constant 0 : i32
    return %arg0, %arg1, %c0_i32 : i32, i32, i32
  }
}

</mosaic_0001>

<llo_original>
// kernel: tpu_custom_call.1
$region0: #{tpu_custom_call.1}
  #allocation0 [shape = 'u32[]', space=smem, size = 0x4, offset = 0x4, fixed_abs, tag = 'smem constant byte address 0x4 - core index']
  #allocation1 [shape = 'u32[144,128]{1,0:T(1,128)}', space=vmem, size = 0x12000, scoped, tag = 'internal scratch']
  #allocation2 [shape = 'f32[8,16]{1,0:T(8,128)}', space=vmem, size = 0x1000, scoped, tag = 'scratch operand']
  %s0 = inlined_call_operand.hbm [shape: bf16[8,16], index: 0, kind: input, shape index: {}]
  %s1 = inlined_call_operand.hbm [shape: bf16[16,16], index: 1, kind: input, shape index: {}]
  %s2 = inlined_call_operand.vmem [shape: f32[1,32], index: 2, kind: input, shape index: {}]
  %s3 = inlined_call_operand.vmem [shape: f32[1,32], index: 3, kind: input, shape index: {}]
  %s4 = inlined_call_operand.hbm [shape: f32[8,16,32], index: 4, kind: output, shape index: {}]
  %s5 = sld [smem:[#allocation0]]
  $region42: #{tpu_custom_call.1} parent=0
    _
  %s7 = ssub.s32 1, %s5
  %s8 = scalar_select 0, %s7, %s5
  $region1: #{tpu_custom_call.1} parent=0
    #allocation3 [shape = 'u8[2048]{0}', space=vmem, size = 0x800, scoped, tag = 'input window, operand 0, single buffered']
    #allocation4 [shape = 's32[1]{0}', space=sflag, size = 0x4, scoped, tag = 'scoped memory for tpu_custom_call.1']
    #allocation5 [shape = 's32[1]{0}', space=sflag, size = 0x4, scoped, tag = 'scoped memory for tpu_custom_call.1']
    #allocation6 [shape = 'u8[4096]{0}', space=vmem, size = 0x1000, scoped, tag = 'input window, operand 1, single buffered']
    #allocation7 [shape = 's32[1]{0}', space=sflag, size = 0x4, scoped, tag = 'scoped memory for tpu_custom_call.1']
    #allocation8 [shape = 'u8[65536]{0}', space=vmem, size = 0x10000, scoped, tag = 'output window, operand 0, single buffered']
    %9 = vsyncpa [#allocation4], 0
    %10 = vsyncpa [#allocation7], 0
    %11 = vsyncpa [#allocation5], 0
    // Predicated region
    $region2: #{tpu_custom_call.1} parent=1 // pred_check
      _
    $region3: #{tpu_custom_call.1} parent=1 // pred_check_branch
      %13 = sbr.rel (0) target = $region5
    $region4: #{tpu_custom_call.1} parent=1 // pred_region
      %s15 = ssub.s32 64, 64
      %16 = vsyncadd [#allocation4], %s15
      %s18 = sshll.u32 [#allocation3], 4
      %s19 = int_to_ptr.vmem [resolvable:$true] %s18
      %21 = dma.hbm_to_vmem [thread:$0]  %s0, 64, %s19, [#allocation4]
    $region5: #{tpu_custom_call.1} parent=1 // pred_fallthru
      _
    // Predicated region
    $region6: #{tpu_custom_call.1} parent=1 // pred_check
      _
    $region7: #{tpu_custom_call.1} parent=1 // pred_check_branch
      %23 = sbr.rel (0) target = $region9
    $region8: #{tpu_custom_call.1} parent=1 // pred_region
      %s25 = ssub.s32 128, 128
      %26 = vsyncadd [#allocation7], %s25
      %s27 = sshll.u32 [#allocation6], 4
      %s28 = int_to_ptr.vmem [resolvable:$true] %s27
      %33 = dma.hbm_to_vmem [thread:$0]  %s1, 128, %s28, [#allocation7], 64, 64, 4
    $region9: #{tpu_custom_call.1} parent=1 // pred_fallthru
      _
    // Predicated region
    $region10: #{tpu_custom_call.1} parent=1 // pred_check
      _
    $region11: #{tpu_custom_call.1} parent=1 // pred_check_branch
      %35 = sbr.rel (0) target = $region13
    $region12: #{tpu_custom_call.1} parent=1 // pred_region
      _
    $region13: #{tpu_custom_call.1} parent=1 // pred_fallthru
      _
    // Predicated region
    $region14: #{tpu_custom_call.1} parent=1 // pred_check
      _
    $region15: #{tpu_custom_call.1} parent=1 // pred_check_branch
      %37 = sbr.rel (0) target = $region17
    $region16: #{tpu_custom_call.1} parent=1 // pred_region
      _
    $region17: #{tpu_custom_call.1} parent=1 // pred_fallthru
      _
    // Predicated region
    $region18: #{tpu_custom_call.1} parent=1 // pred_check
      _
    $region19: #{tpu_custom_call.1} parent=1 // pred_check_branch
      %39 = sbr.rel (0) target = $region21
    $region20: #{tpu_custom_call.1} parent=1 // pred_region
      %40 = dma.done [#allocation4], 64
    $region21: #{tpu_custom_call.1} parent=1 // pred_fallthru
      _
    // Predicated region
    $region22: #{tpu_custom_call.1} parent=1 // pred_check
      _
    $region23: #{tpu_custom_call.1} parent=1 // pred_check_branch
      %42 = sbr.rel (0) target = $region25
    $region24: #{tpu_custom_call.1} parent=1 // pred_region
      %43 = dma.done [#allocation7], 128
    $region25: #{tpu_custom_call.1} parent=1 // pred_fallthru
      _
    %p45 = scmp.eq.s32.totalorder 0, 0
    // Predicated region
    $region26: #{tpu_custom_call.1} parent=1 // pred_check
      %p46 = pneg %p45
    $region27: #{tpu_custom_call.1} parent=1 // pred_check_branch
      %48 = sbr.rel (%p46) target = $region29
    $region28: #{tpu_custom_call.1} parent=1 // pred_region
      %vm49 = vcmask 130048
      %50 = vst.msk [vmem:[#allocation2] sm:$0xff] %vm49, 0.0
    $region29: #{tpu_custom_call.1} parent=1 // pred_fallthru
      _
    %v51 = vld [vmem:[#allocation2] sm:$0xff]
    %v52 = vld [vmem:[#allocation3] sm:$0xf]
    %v53 = vld [vmem:[#allocation6] sm:$0xf]
    %v54 = vld [vmem:[#allocation6 + $0x4] sm:$0xf]
    %v57 = vunpack.c.l.b16 %v53
    %v58 = vunpack.c.l.b16 %v54
    %v59 = vpack.c.b16 %v58, %v57
    %vm61 = vcmask 130048
    %v63 = vsel %vm61, %v52, 0
    %65 = vmatprep.subr.bf16.mxu0 0
    %66 = vmatpush1.bf16.msra.mxu0 %v59
    %67 = vmatprep.subr.bf16.mxu0 0
    %68 = vmatpush1.bf16.msra.mxu0 0
    %69 = vmatprep.subr.bf16.mxu0 0
    %70 = vmatpush1.bf16.msra.mxu0 0
    %71 = vmatprep.subr.bf16.mxu0 0
    %72 = vmatpush1.bf16.msra.mxu0 0
    %73 = vmatprep.subr.bf16.mxu0 0
    %74 = vmatpush1.bf16.msra.mxu0 0
    %75 = vmatprep.subr.bf16.mxu0 0
    %76 = vmatpush1.bf16.msra.mxu0 0
    %77 = vmatprep.subr.bf16.mxu0 0
    %78 = vmatpush1.bf16.msra.mxu0 0
    %79 = vmatprep.subr.bf16.mxu0 0
    %80 = vmatpush1.bf16.msra.mxu0 0
    %81 = vmatprep.subr.bf16.mxu0 0
    %82 = vmatpush1.bf16.msra.mxu0 0
    %83 = vmatprep.subr.bf16.mxu0 0
    %84 = vmatpush1.bf16.msra.mxu0 0
    %85 = vmatprep.subr.bf16.mxu0 0
    %86 = vmatpush1.bf16.msra.mxu0 0
    %87 = vmatprep.subr.bf16.mxu0 0
    %88 = vmatpush1.bf16.msra.mxu0 0
    %89 = vmatprep.subr.bf16.mxu0 0
    %90 = vmatpush1.bf16.msra.mxu0 0
    %91 = vmatprep.subr.bf16.mxu0 0
    %92 = vmatpush1.bf16.msra.mxu0 0
    %93 = vmatprep.subr.bf16.mxu0 0
    %94 = vmatpush1.bf16.msra.mxu0 0
    %95 = vmatprep.subr.bf16.mxu0 0
    %96 = vmatpush1.bf16.msra.mxu0 0
    %97 = vmatprep.mubr.bf16.mxu0 0
    %98 = vmatmul.mubr.bf16.gmra.mrb[0].mxu0 %v63
    %v99 = vpop.f32.mrb[0].mxu0
    %v100 = vadd.f32 0.0, %v99
    %v101 = vpop.f32.mrb[0].mxu0
    %v102 = vpop.f32.mrb[0].mxu0
    %v103 = vpop.f32.mrb[0].mxu0
    %104 = vdwg.mxu0
    %v105 = vadd.f32 %v51, %v100
    %106 = vst.msk [vmem:[#allocation2] sm:$0xff] %vm61, %v105
    // Predicated region
    $region30: #{tpu_custom_call.1} parent=1 // pred_check
      %p107 = pneg %p45
    $region31: #{tpu_custom_call.1} parent=1 // pred_check_branch
      %109 = sbr.rel (%p107) target = $region33
    $region32: #{tpu_custom_call.1} parent=1 // pred_region
      %v110 = vld [vmem:[#allocation2] sm:$0xff]
      %v111 = vld [vmem:[%s2] sm:$0x1]
      %v112 = vld [vmem:[%s3] sm:$0x1]
      %v113 = vlaneseq
      %v114 = vshrl.u32 %v113, 7
      %v115 = vsub.s32 0, %v114
      %v116 = vrot.slane %v110, %v115
      %118 = vbcast.lane.b32.xlu0 %v116, 256
      %v119 = vpop.permute.xlu0 %118
      %s121 = sor.u32 256, 8
      %122 = vbcast.lane.b32.xlu0 %v116, %s121
      %v123 = vpop.permute.xlu0 %122
      %v124 = vlaneseq
      %v125 = vshrl.u32 %v124, 7
      %v126 = vsub.s32 1, %v125
      %v127 = vrot.slane %v110, %v126
      %129 = vbcast.lane.b32.xlu0 %v127, 256
      %v130 = vpop.permute.xlu0 %129
      %s132 = sor.u32 256, 8
      %133 = vbcast.lane.b32.xlu0 %v127, %s132
      %v134 = vpop.permute.xlu0 %133
      %v135 = vlaneseq
      %v136 = vshrl.u32 %v135, 7
      %v137 = vsub.s32 2, %v136
      %v138 = vrot.slane %v110, %v137
      %140 = vbcast.lane.b32.xlu0 %v138, 256
      %v141 = vpop.permute.xlu0 %140
      %s143 = sor.u32 256, 8
      %144 = vbcast.lane.b32.xlu0 %v138, %s143
      %v145 = vpop.permute.xlu0 %144
      %v146 = vlaneseq
      %v147 = vshrl.u32 %v146, 7
      %v148 = vsub.s32 3, %v147
      %v149 = vrot.slane %v110, %v148
      %151 = vbcast.lane.b32.xlu0 %v149, 256
      %v152 = vpop.permute.xlu0 %151
      %s154 = sor.u32 256, 8
      %155 = vbcast.lane.b32.xlu0 %v149, %s154
      %v156 = vpop.permute.xlu0 %155
      %v157 = vlaneseq
      %v158 = vshrl.u32 %v157, 7
      %v159 = vsub.s32 4, %v158
      %v160 = vrot.slane %v110, %v159
      %162 = vbcast.lane.b32.xlu0 %v160, 256
      %v163 = vpop.permute.xlu0 %162
      %s165 = sor.u32 256, 8
      %166 = vbcast.lane.b32.xlu0 %v160, %s165
      %v167 = vpop.permute.xlu0 %166
      %v168 = vlaneseq
      %v169 = vshrl.u32 %v168, 7
      %v170 = vsub.s32 5, %v169
      %v171 = vrot.slane %v110, %v170
      %173 = vbcast.lane.b32.xlu0 %v171, 256
      %v174 = vpop.permute.xlu0 %173
      %s176 = sor.u32 256, 8
      %177 = vbcast.lane.b32.xlu0 %v171, %s176
      %v178 = vpop.permute.xlu0 %177
      %v179 = vlaneseq
      %v180 = vshrl.u32 %v179, 7
      %v181 = vsub.s32 6, %v180
      %v182 = vrot.slane %v110, %v181
      %184 = vbcast.lane.b32.xlu0 %v182, 256
      %v185 = vpop.permute.xlu0 %184
      %s187 = sor.u32 256, 8
      %188 = vbcast.lane.b32.xlu0 %v182, %s187
      %v189 = vpop.permute.xlu0 %188
      %v190 = vlaneseq
      %v191 = vshrl.u32 %v190, 7
      %v192 = vsub.s32 7, %v191
      %v193 = vrot.slane %v110, %v192
      %195 = vbcast.lane.b32.xlu0 %v193, 256
      %v196 = vpop.permute.xlu0 %195
      %s198 = sor.u32 256, 8
      %199 = vbcast.lane.b32.xlu0 %v193, %s198
      %v200 = vpop.permute.xlu0 %199
      %v202 = vlaneseq
      %v203 = vshrl.u32 %v202, 7
      %v204 = vsub.s32 0, %v203
      %v205 = vrot.slane %v111, %v204
      %v207 = vmul.f32 %v119, %v205
      %v208 = vmul.f32 %v123, %v205
      %v209 = vmul.f32 %v130, %v205
      %v210 = vmul.f32 %v134, %v205
      %v211 = vmul.f32 %v141, %v205
      %v212 = vmul.f32 %v145, %v205
      %v213 = vmul.f32 %v152, %v205
      %v214 = vmul.f32 %v156, %v205
      %v215 = vmul.f32 %v163, %v205
      %v216 = vmul.f32 %v167, %v205
      %v217 = vmul.f32 %v174, %v205
      %v218 = vmul.f32 %v178, %v205
      %v219 = vmul.f32 %v185, %v205
      %v220 = vmul.f32 %v189, %v205
      %v221 = vmul.f32 %v196, %v205
      %v222 = vmul.f32 %v200, %v205
      %v224 = vlaneseq
      %v225 = vshrl.u32 %v224, 7
      %v226 = vsub.s32 0, %v225
      %v227 = vrot.slane %v112, %v226
      %v229 = vadd.f32 %v207, %v227
      %v230 = vadd.f32 %v208, %v227
      %v231 = vadd.f32 %v209, %v227
      %v232 = vadd.f32 %v210, %v227
      %v233 = vadd.f32 %v211, %v227
      %v234 = vadd.f32 %v212, %v227
      %v235 = vadd.f32 %v213, %v227
      %v236 = vadd.f32 %v214, %v227
      %v237 = vadd.f32 %v215, %v227
      %v238 = vadd.f32 %v216, %v227
      %v239 = vadd.f32 %v217, %v227
      %v240 = vadd.f32 %v218, %v227
      %v241 = vadd.f32 %v219, %v227
      %v242 = vadd.f32 %v220, %v227
      %v243 = vadd.f32 %v221, %v227
      %v244 = vadd.f32 %v222, %v227
      %vm245 = vcmask 261120
      %246 = vst.msk [vmem:[#allocation8] sm:$0xff] %vm245, %v229
      %247 = vst.msk [vmem:[#allocation8 + $0x8] sm:$0xff] %vm245, %v230
      %248 = vst.msk [vmem:[#allocation8 + $0x10] sm:$0xff] %vm245, %v231
      %249 = vst.msk [vmem:[#allocation8 + $0x18] sm:$0xff] %vm245, %v232
      %250 = vst.msk [vmem:[#allocation8 + $0x20] sm:$0xff] %vm245, %v233
      %251 = vst.msk [vmem:[#allocation8 + $0x28] sm:$0xff] %vm245, %v234
      %252 = vst.msk [vmem:[#allocation8 + $0x30] sm:$0xff] %vm245, %v235
      %253 = vst.msk [vmem:[#allocation8 + $0x38] sm:$0xff] %vm245, %v236
      %254 = vst.msk [vmem:[#allocation8 + $0x40] sm:$0xff] %vm245, %v237
      %255 = vst.msk [vmem:[#allocation8 + $0x48] sm:$0xff] %vm245, %v238
      %256 = vst.msk [vmem:[#allocation8 + $0x50] sm:$0xff] %vm245, %v239
      %257 = vst.msk [vmem:[#allocation8 + $0x58] sm:$0xff] %vm245, %v240
      %258 = vst.msk [vmem:[#allocation8 + $0x60] sm:$0xff] %vm245, %v241
      %259 = vst.msk [vmem:[#allocation8 + $0x68] sm:$0xff] %vm245, %v242
      %260 = vst.msk [vmem:[#allocation8 + $0x70] sm:$0xff] %vm245, %v243
      %261 = vst.msk [vmem:[#allocation8 + $0x78] sm:$0xff] %vm245, %v244
    $region33: #{tpu_custom_call.1} parent=1 // pred_fallthru
      _
    // Predicated region
    $region34: #{tpu_custom_call.1} parent=1 // pred_check
      _
    $region35: #{tpu_custom_call.1} parent=1 // pred_check_branch
      %263 = sbr.rel (0) target = $region37
    $region36: #{tpu_custom_call.1} parent=1 // pred_region
      %s265 = ssub.s32 2048, 2048
      %266 = vsyncadd [#allocation5], %s265
      %s267 = sshll.u32 [#allocation8], 4
      %s268 = int_to_ptr.vmem [resolvable:$true] %s267
      %273 = dma.vmem_to_hbm [thread:$0]  %s268, 2048, %s4, [#allocation5], 128, 128, 8
    $region37: #{tpu_custom_call.1} parent=1 // pred_fallthru
      _
    // Predicated region
    $region38: #{tpu_custom_call.1} parent=1 // pred_check
      _
    $region39: #{tpu_custom_call.1} parent=1 // pred_check_branch
      %275 = sbr.rel (0) target = $region41
    $region40: #{tpu_custom_call.1} parent=1 // pred_region
      %276 = dma.done [#allocation5], 2048
    $region41: #{tpu_custom_call.1} parent=1 // pred_fallthru
      _
    %277 = vsyncpa [#allocation4], 1
    %278 = vsyncpa [#allocation7], 1
    %279 = vsyncpa [#allocation5], 1

</llo_original>
